<compile_context>
chip_gen: v7x
topology: tpu7x:2x2x1
jax: 0.10.0
libtpu: 0.0.40
codegen_flags: <defaults>
</compile_context>

<pallas_src>
import functools

import jax
import jax.numpy as jnp
from jax.experimental import pallas as pl
from jax.experimental.pallas import tpu as pltpu

LANE = 128
_MIB = 1024 * 1024


def _round_up(x, m):
    return ((x + m - 1) // m) * m


# ----------------------------------------------------------------------------
# Generation-aware scoped-VMEM budget.
# ----------------------------------------------------------------------------
_VMEM_LIMIT_CACHE = [None]


def _vmem_limit_bytes():
    if _VMEM_LIMIT_CACHE[0] is not None:
        return _VMEM_LIMIT_CACHE[0]
    cap = None
    try:
        cap = getattr(pltpu.get_tpu_info(), "vmem_capacity_bytes", None)
    except Exception:
        cap = None
    if cap is None:
        try:
            kind = jax.devices()[0].device_kind.lower()
            cap = 64 * _MIB if "v7" in kind else 128 * _MIB
        except Exception:
            cap = 64 * _MIB
    # ~96 MiB on 128-MiB parts (v5e/v6e); ~40 MiB on 64-MiB parts (v7x) so the
    # compiler keeps internal-scratch headroom.
    limit = 96 * _MIB if cap >= 100 * _MIB else 40 * _MIB
    _VMEM_LIMIT_CACHE[0] = limit
    return limit


# ----------------------------------------------------------------------------
# Tile selection: large tiles, >= 2 row tiles when the graph allows it.
# ----------------------------------------------------------------------------
def _choose_tiles(n):
    n128 = _round_up(n, LANE)
    tile_k = min(1024, n128)          # reduction tile (adj columns)
    tile_m = tile_k                   # row tile
    # Keep >= 2 row tiles when possible so the "parallel" row axis shards
    # across both v7x TensorCores (and megacore on v5e/v6e).
    if _round_up(n, tile_k) // tile_m < 2 and tile_m > LANE:
        tile_m = tile_k // 2          # still a multiple of 32 and divides n_pad
    n_pad = _round_up(n, tile_k)      # tile_m | tile_k | n_pad
    return tile_m, tile_k, n_pad


def _hl_fits_vmem(n_pad, tile_m, tile_k, cin_pad, cout_pad, out_bytes,
                  vmem_limit):
    """Can the full hl (n_pad x cout_pad bf16) stay resident in VMEM?"""
    fixed = (
        2 * tile_m * tile_k * 1              # adj tile (int8), double-buffered
        + 2 * tile_m * cin_pad * 2           # x root tile (bf16)
        + 2 * cin_pad * cout_pad * 2         # Wr (bf16)
        + 2 * 8 * cout_pad * 4               # bias (f32, sublane-padded)
        + 2 * tile_m * LANE * 4              # 1/deg (lane-padded f32)
        + 2 * tile_m * cout_pad * out_bytes  # output tile
        + tile_m * cout_pad * 4              # f32 accumulator scratch
    )
    resident = 2 * n_pad * cout_pad * 2      # full hl, worst-case 2 buffers
    return fixed + resident <= int(0.8 * vmem_limit)


# ----------------------------------------------------------------------------
# Kernel 1: per-row-tile projection  hl = x @ Wl'  (bf16 out)
# ----------------------------------------------------------------------------
def project_kernel(x_ref, wl_ref, hl_ref):
    hl_ref[...] = jnp.dot(x_ref[...], wl_ref[...],
                          preferred_element_type=jnp.float32
                          ).astype(hl_ref.dtype)


def project(x, wl, *, tile_m, vmem_limit):
    n_pad, cin_pad = x.shape
    cout_pad = wl.shape[1]
    return pl.pallas_call(
        project_kernel,
        out_shape=jax.ShapeDtypeStruct((n_pad, cout_pad), jnp.bfloat16),
        grid=(n_pad // tile_m,),
        in_specs=[
            pl.BlockSpec((tile_m, cin_pad), lambda i: (i, 0)),
            pl.BlockSpec((cin_pad, cout_pad), lambda i: (0, 0)),
        ],
        out_specs=pl.BlockSpec((tile_m, cout_pad), lambda i: (i, 0)),
        compiler_params=pltpu.CompilerParams(
            dimension_semantics=("parallel",),
            vmem_limit_bytes=vmem_limit,
        ),
    )(x, wl)


# ----------------------------------------------------------------------------
# Kernel 2: tiled aggregation + fused epilogue
#   out[i] = (sum_k adj[i,k] @ hl[k]) * (1/deg[i]) + x[i] @ Wr' + b'  (+relu)
# ----------------------------------------------------------------------------
def aggregate_kernel(adj_ref, hl_ref, x_ref, wr_ref, b_ref, inv_deg_ref,
                     o_ref, acc_ref, *, apply_relu, tile_k, hl_resident):
    k = pl.program_id(1)

    @pl.when(k == 0)
    def _():
        acc_ref[...] = jnp.zeros_like(acc_ref)

    # adj is stored as int8 (binary graph, 1 B/elem over HBM); cast to bf16
    # on-chip so the matmul uses the bf16 MXU path on every generation
    # (v7x has no int MXU path -- int8 here is purely a storage format).
    adj = adj_ref[...].astype(jnp.bfloat16)
    if hl_resident:
        start = pl.multiple_of(k * tile_k, tile_k)
        hl = hl_ref[pl.ds(start, tile_k), :]
    else:
        hl = hl_ref[...]
    acc_ref[...] += jnp.dot(adj, hl, preferred_element_type=jnp.float32)

    @pl.when(k == pl.num_programs(1) - 1)
    def _():
        # Fused epilogue: exact f32 1/deg mean scale, root branch x @ Wr,
        # folded BN shift / bias, optional relu.  No hr HBM round trip.
        root = jnp.dot(x_ref[...], wr_ref[...],
                       preferred_element_type=jnp.float32)
        out = acc_ref[...] * inv_deg_ref[...] + root + b_ref[...]
        if apply_relu:
            out = jnp.maximum(out, 0.0)
        o_ref[...] = out.astype(o_ref.dtype)


def aggregate(adj, hl, x, wr, b, inv_deg, *, tile_m, tile_k, apply_relu,
              out_dtype, hl_resident, vmem_limit):
    n_pad = adj.shape[0]
    cin_pad = x.shape[1]
    cout_pad = hl.shape[1]
    grid = (n_pad // tile_m, n_pad // tile_k)

    if hl_resident:
        # Full-array block, constant index map: hl is DMA'd once per layer and
        # stays resident instead of being re-streamed for every row tile.
        hl_spec = pl.BlockSpec((n_pad, cout_pad), lambda i, k: (0, 0))
    else:
        hl_spec = pl.BlockSpec((tile_k, cout_pad), lambda i, k: (k, 0))

    kernel = functools.partial(aggregate_kernel, apply_relu=apply_relu,
                               tile_k=tile_k, hl_resident=hl_resident)
    return pl.pallas_call(
        kernel,
        out_shape=jax.ShapeDtypeStruct((n_pad, cout_pad), out_dtype),
        grid=grid,
        in_specs=[
            pl.BlockSpec((tile_m, tile_k), lambda i, k: (i, k)),     # adj (int8)
            hl_spec,                                                 # hl (bf16)
            pl.BlockSpec((tile_m, cin_pad), lambda i, k: (i, 0)),    # x root tile
            pl.BlockSpec((cin_pad, cout_pad), lambda i, k: (0, 0)),  # Wr
            pl.BlockSpec((1, cout_pad), lambda i, k: (0, 0)),        # bias
            pl.BlockSpec((tile_m, 1), lambda i, k: (i, 0)),          # 1/deg (f32)
        ],
        out_specs=pl.BlockSpec((tile_m, cout_pad), lambda i, k: (i, 0)),
        scratch_shapes=[pltpu.VMEM((tile_m, cout_pad), jnp.float32)],
        compiler_params=pltpu.CompilerParams(
            dimension_semantics=("parallel", "arbitrary"),
            vmem_limit_bytes=vmem_limit,
        ),
    )(adj, hl, x, wr, b, inv_deg)


# ----------------------------------------------------------------------------
# Parameter init (deterministic, mirrors module __init__ shapes).
# ----------------------------------------------------------------------------
def init_sage_encoder(key, in_channels, hidden_channels, out_channels,
                      num_layers):
    dims = [in_channels] + [hidden_channels] * (num_layers - 1) + [out_channels]
    convs = []
    bns = []
    for i in range(num_layers):
        cin, cout = dims[i], dims[i + 1]
        key, k1, k2 = jax.random.split(key, 3)
        wl = jax.random.normal(k1, (cin, cout), jnp.float32) * 0.1   # lin_l
        wr = jax.random.normal(k2, (cin, cout), jnp.float32) * 0.1   # lin_r
        b = jnp.zeros((1, cout), jnp.float32)
        convs.append((wl, wr, b))
        if i < num_layers - 1:
            gamma = jnp.ones((cout,), jnp.float32)
            beta = jnp.zeros((cout,), jnp.float32)
            run_mean = jnp.zeros((cout,), jnp.float32)
            run_var = jnp.ones((cout,), jnp.float32)
            bns.append((gamma, beta, run_mean, run_var))
    return {"convs": convs, "bns": bns}


# ----------------------------------------------------------------------------
# Encoder forward (glue / padding / BN fold in plain JAX; hot path in Pallas).
# ----------------------------------------------------------------------------
def sage_encoder_forward(params, x, adj, *, dropout=0.5, eps=1e-5):
    n, in_c = x.shape
    num_layers = len(params["convs"])
    out_c = params["convs"][-1][0].shape[1]
    vmem_limit = _vmem_limit_bytes()

    tile_m, tile_k, n_pad = _choose_tiles(n)

    # Binary adjacency stays un-normalized and is stored as int8 (1 B/elem over
    # HBM); the exact f32 1/deg row scale is applied in the aggregate epilogue.
    # TODO(synk): weighted (non-binary) adjacencies would need a bf16 adj path.
    adj_p = jnp.zeros((n_pad, n_pad), jnp.int8)
    adj_p = adj_p.at[:n, :n].set(adj.astype(jnp.int8))

    deg = jnp.clip(jnp.sum(adj, axis=1, keepdims=True), 1.0, None)
    inv_deg = jnp.ones((n_pad, 1), jnp.float32)
    inv_deg = inv_deg.at[:n, :].set((1.0 / deg).astype(jnp.float32))

    cin_pad0 = _round_up(in_c, LANE)
    x_p = jnp.zeros((n_pad, cin_pad0), jnp.bfloat16)
    x_p = x_p.at[:n, :in_c].set(x.astype(jnp.bfloat16))

    for i in range(num_layers):
        wl, wr, b = params["convs"][i]
        cin, cout = wl.shape
        last = (i == num_layers - 1)

        if not last:
            # Fold BatchNorm1d (eval: running stats) into weights / bias.
            gamma, beta, run_mean, run_var = params["bns"][i]
            scale = gamma / jnp.sqrt(run_var + eps)
            shift = beta - run_mean * scale
            wl_f = wl * scale[None, :]
            wr_f = wr * scale[None, :]
            b_f = b * scale[None, :] + shift[None, :]
        else:
            wl_f, wr_f, b_f = wl, wr, b

        cin_pad = _round_up(cin, LANE)
        cout_pad = _round_up(cout, LANE)
        assert x_p.shape[1] == cin_pad, (x_p.shape, cin_pad)

        wl_p = jnp.zeros((cin_pad, cout_pad), jnp.bfloat16)
        wl_p = wl_p.at[:cin, :cout].set(wl_f.astype(jnp.bfloat16))
        wr_p = jnp.zeros((cin_pad, cout_pad), jnp.bfloat16)
        wr_p = wr_p.at[:cin, :cout].set(wr_f.astype(jnp.bfloat16))
        b_p = jnp.zeros((1, cout_pad), jnp.float32).at[:, :cout].set(b_f)

        out_dtype = jnp.float32 if last else jnp.bfloat16
        out_bytes = 4 if last else 2

        # Neighbor branch reassociated as adj @ (x @ Wl): the N^2 matmul runs
        # in 128-padded output-channel space.
        hl = project(x_p, wl_p, tile_m=tile_m, vmem_limit=vmem_limit)

        hl_resident = _hl_fits_vmem(n_pad, tile_m, tile_k, cin_pad, cout_pad,
                                    out_bytes, vmem_limit)
        x_p = aggregate(adj_p, hl, x_p, wr_p, b_p, inv_deg,
                        tile_m=tile_m, tile_k=tile_k,
                        apply_relu=not last, out_dtype=out_dtype,
                        hl_resident=hl_resident, vmem_limit=vmem_limit)
        # F.dropout(training=False) is the identity in eval mode.
        # TODO(synk): training-mode dropout / batch-stat BN not implemented.

    return x_p[:n, :out_c]


# ----------------------------------------------------------------------------
# Plain-JAX f32 reference for a loose correctness check.
# ----------------------------------------------------------------------------
def sage_encoder_reference(params, x, adj, eps=1e-5):
    deg = jnp.clip(jnp.sum(adj, axis=1, keepdims=True), 1.0, None)
    a = adj / deg
    h = x
    n_layers = len(params["convs"])
    for i in range(n_layers):
        wl, wr, b = params["convs"][i]
        y = (a @ h) @ wl + h @ wr + b
        if i < n_layers - 1:
            gamma, beta, m, v = params["bns"][i]
            y = (y - m) / jnp.sqrt(v + eps) * gamma + beta
            y = jnp.maximum(y, 0.0)
        h = y
    return h


if __name__ == "__main__":
    N = 64                # number of graph nodes
    IN_C = 16
    HID_C = 32
    OUT_C = 8
    NUM_LAYERS = 3

    key = jax.random.PRNGKey(0)
    k_x, k_adj, k_param = jax.random.split(key, 3)

    x = jax.random.normal(k_x, (N, IN_C), jnp.float32)
    # Random symmetric binary adjacency (no self loops required by SAGEConv).
    upper = jax.random.bernoulli(k_adj, p=0.1, shape=(N, N)).astype(jnp.float32)
    adj = jnp.triu(upper, k=1)
    adj = adj + adj.T

    params = init_sage_encoder(k_param, IN_C, HID_C, OUT_C, NUM_LAYERS)

    out = sage_encoder_forward(params, x, adj)
    out = jax.block_until_ready(out)

    assert out.shape == (N, OUT_C), out.shape
    assert bool(jnp.all(jnp.isfinite(out)))

    ref = sage_encoder_reference(params, x, adj)
    max_err = float(jnp.max(jnp.abs(out - ref)))
    assert max_err < 0.1, f"max abs error vs f32 reference too large: {max_err}"

    print("KERNEL_OK")
</pallas_src>

<mosaic_0001>
module attributes {stable_mosaic.version = 11 : i64} {
  func.func @project_kernel(%arg0: i32, %arg1: memref<128x128xbf16, #tpu.memory_space<vmem>>, %arg2: memref<128x128xbf16, #tpu.memory_space<vmem>>, %arg3: memref<128x128xbf16, #tpu.memory_space<vmem>>) attributes {dimension_semantics = [#tpu.dimension_semantics<parallel>], iteration_bounds = array<i64: 1>, scalar_prefetch = 0 : i64, scratch_operands = 0 : i64, tpu.core_type = #tpu.core_type<tc>, window_params = [{transform_indices = @transform_0, window_bounds = array<i64: 128, 128>}, {pipeline_mode = #tpu.pipeline_mode<synchronous>, transform_indices = @transform_1, window_bounds = array<i64: 128, 128>}, {transform_indices = @transform_2, window_bounds = array<i64: 128, 128>}]} {
    %c0 = arith.constant 0 : index
    %c0_0 = arith.constant 0 : index
    %0 = vector.load %arg1[%c0, %c0_0] : memref<128x128xbf16, #tpu.memory_space<vmem>>, vector<128x128xbf16>
    %c0_1 = arith.constant 0 : index
    %c0_2 = arith.constant 0 : index
    %1 = vector.load %arg2[%c0_1, %c0_2] : memref<128x128xbf16, #tpu.memory_space<vmem>>, vector<128x128xbf16>
    %cst = arith.constant dense<0.000000e+00> : vector<128x128xf32>
    %2 = tpu.matmul %0, %1, %cst {dimension_numbers = #tpu.dot_dimension_numbers<[1], [0], [0], [1], [0, 0, 1, 1], [], []>} : vector<128x128xbf16>, vector<128x128xbf16>, vector<128x128xf32> -> vector<128x128xf32>
    %3 = arith.truncf %2 : vector<128x128xf32> to vector<128x128xbf16>
    %c0_3 = arith.constant 0 : index
    %c0_4 = arith.constant 0 : index
    %4 = vector.load %arg3[%c0_3, %c0_4] : memref<128x128xbf16, #tpu.memory_space<vmem>>, vector<128x128xbf16>
    tpu.vector_store %arg3[%c0_3, %c0_4], %3 {strides = array<i32>} : memref<128x128xbf16, #tpu.memory_space<vmem>>, vector<128x128xbf16>,
    return
  }
  func.func @transform_0(%arg0: i32) -> (i32, i32) {
    %c0_i32 = arith.constant 0 : i32
    %c0_i32_0 = arith.constant 0 : i32
    return %arg0, %c0_i32 : i32, i32
  }
  func.func @transform_1(%arg0: i32) -> (i32, i32) {
    %c0_i32 = arith.constant 0 : i32
    %c0_i32_0 = arith.constant 0 : i32
    %c0_i32_1 = arith.constant 0 : i32
    return %c0_i32, %c0_i32_0 : i32, i32
  }
  func.func @transform_2(%arg0: i32) -> (i32, i32) {
    %c0_i32 = arith.constant 0 : i32
    %c0_i32_0 = arith.constant 0 : i32
    return %arg0, %c0_i32 : i32, i32
  }
}

</mosaic_0001>

<llo_original>
// kernel: tpu_custom_call.1
$region0: #{tpu_custom_call.1}
  #allocation0 [shape = 'u32[]', space=smem, size = 0x4, offset = 0x4, fixed_abs, tag = 'smem constant byte address 0x4 - core index']
  #allocation1 [shape = 'u32[144,128]{1,0:T(1,128)}', space=vmem, size = 0x12000, scoped, tag = 'internal scratch']
  %s0 = inlined_call_operand.hbm [shape: bf16[128,128], index: 0, kind: input, shape index: {}]
  %s1 = inlined_call_operand.hbm [shape: bf16[128,128], index: 1, kind: input, shape index: {}]
  %s2 = inlined_call_operand.hbm [shape: bf16[128,128], index: 2, kind: output, shape index: {}]
  %s3 = sld [smem:[#allocation0]]
  $region26: #{tpu_custom_call.1} parent=0
    _
  %s5 = ssub.s32 1, %s3
  %s6 = scalar_select 0, %s5, %s3
  $region1: #{tpu_custom_call.1} parent=0
    #allocation2 [shape = 'u8[32768]{0}', space=vmem, size = 0x8000, scoped, tag = 'input window, operand 0, single buffered']
    #allocation3 [shape = 's32[1]{0}', space=sflag, size = 0x4, scoped, tag = 'scoped memory for tpu_custom_call.1']
    #allocation4 [shape = 's32[1]{0}', space=sflag, size = 0x4, scoped, tag = 'scoped memory for tpu_custom_call.1']
    #allocation5 [shape = 'u8[32768]{0}', space=vmem, size = 0x8000, scoped, tag = 'input window, operand 1, single buffered']
    #allocation6 [shape = 's32[1]{0}', space=sflag, size = 0x4, scoped, tag = 'scoped memory for tpu_custom_call.1']
    #allocation7 [shape = 'u8[32768]{0}', space=vmem, size = 0x8000, scoped, tag = 'output window, operand 0, single buffered']
    %7 = vsyncpa [#allocation3], 0
    %8 = vsyncpa [#allocation6], 0
    %9 = vsyncpa [#allocation4], 0
    // Predicated region
    $region2: #{tpu_custom_call.1} parent=1 // pred_check
      _
    $region3: #{tpu_custom_call.1} parent=1 // pred_check_branch
      %11 = sbr.rel (0) target = $region5
    $region4: #{tpu_custom_call.1} parent=1 // pred_region
      %s13 = ssub.s32 1024, 1024
      %14 = vsyncadd [#allocation3], %s13
      %s15 = sshll.u32 [#allocation2], 4
      %s16 = int_to_ptr.vmem [resolvable:$true] %s15
      %21 = dma.hbm_to_vmem [thread:$0]  %s0, 1024, %s16, [#allocation3], 64, 64, 4
    $region5: #{tpu_custom_call.1} parent=1 // pred_fallthru
      _
    // Predicated region
    $region6: #{tpu_custom_call.1} parent=1 // pred_check
      _
    $region7: #{tpu_custom_call.1} parent=1 // pred_check_branch
      %23 = sbr.rel (0) target = $region9
    $region8: #{tpu_custom_call.1} parent=1 // pred_region
      %s25 = ssub.s32 1024, 1024
      %26 = vsyncadd [#allocation6], %s25
      %s27 = sshll.u32 [#allocation5], 4
      %s28 = int_to_ptr.vmem [resolvable:$true] %s27
      %33 = dma.hbm_to_vmem [thread:$0]  %s1, 1024, %s28, [#allocation6], 64, 64, 4
    $region9: #{tpu_custom_call.1} parent=1 // pred_fallthru
      _
    // Predicated region
    $region10: #{tpu_custom_call.1} parent=1 // pred_check
      _
    $region11: #{tpu_custom_call.1} parent=1 // pred_check_branch
      %35 = sbr.rel (0) target = $region13
    $region12: #{tpu_custom_call.1} parent=1 // pred_region
      %36 = dma.done [#allocation3], 1024
    $region13: #{tpu_custom_call.1} parent=1 // pred_fallthru
      _
    // Predicated region
    $region14: #{tpu_custom_call.1} parent=1 // pred_check
      _
    $region15: #{tpu_custom_call.1} parent=1 // pred_check_branch
      %38 = sbr.rel (0) target = $region17
    $region16: #{tpu_custom_call.1} parent=1 // pred_region
      %39 = dma.done [#allocation6], 1024
    $region17: #{tpu_custom_call.1} parent=1 // pred_fallthru
      _
    %v41 = vld [vmem:[#allocation2] sm:$0xf]
    %v42 = vld [vmem:[#allocation2 + $0x4] sm:$0xf]
    %v43 = vld [vmem:[#allocation2 + $0x8] sm:$0xf]
    %v44 = vld [vmem:[#allocation2 + $0xc] sm:$0xf]
    %v45 = vld [vmem:[#allocation2 + $0x10] sm:$0xf]
    %v46 = vld [vmem:[#allocation2 + $0x14] sm:$0xf]
    %v47 = vld [vmem:[#allocation2 + $0x18] sm:$0xf]
    %v48 = vld [vmem:[#allocation2 + $0x1c] sm:$0xf]
    %v49 = vld [vmem:[#allocation2 + $0x20] sm:$0xf]
    %v50 = vld [vmem:[#allocation2 + $0x24] sm:$0xf]
    %v51 = vld [vmem:[#allocation2 + $0x28] sm:$0xf]
    %v52 = vld [vmem:[#allocation2 + $0x2c] sm:$0xf]
    %v53 = vld [vmem:[#allocation2 + $0x30] sm:$0xf]
    %v54 = vld [vmem:[#allocation2 + $0x34] sm:$0xf]
    %v55 = vld [vmem:[#allocation2 + $0x38] sm:$0xf]
    %v56 = vld [vmem:[#allocation2 + $0x3c] sm:$0xf]
    %v57 = vld [vmem:[#allocation5] sm:$0xf]
    %v58 = vld [vmem:[#allocation5 + $0x4] sm:$0xf]
    %v59 = vld [vmem:[#allocation5 + $0x8] sm:$0xf]
    %v60 = vld [vmem:[#allocation5 + $0xc] sm:$0xf]
    %v61 = vld [vmem:[#allocation5 + $0x10] sm:$0xf]
    %v62 = vld [vmem:[#allocation5 + $0x14] sm:$0xf]
    %v63 = vld [vmem:[#allocation5 + $0x18] sm:$0xf]
    %v64 = vld [vmem:[#allocation5 + $0x1c] sm:$0xf]
    %v65 = vld [vmem:[#allocation5 + $0x20] sm:$0xf]
    %v66 = vld [vmem:[#allocation5 + $0x24] sm:$0xf]
    %v67 = vld [vmem:[#allocation5 + $0x28] sm:$0xf]
    %v68 = vld [vmem:[#allocation5 + $0x2c] sm:$0xf]
    %v69 = vld [vmem:[#allocation5 + $0x30] sm:$0xf]
    %v70 = vld [vmem:[#allocation5 + $0x34] sm:$0xf]
    %v71 = vld [vmem:[#allocation5 + $0x38] sm:$0xf]
    %v72 = vld [vmem:[#allocation5 + $0x3c] sm:$0xf]
    %v89 = vunpack.c.l.b16 %v41
    %v90 = vunpack.c.l.b16 %v42
    %v91 = vunpack.c.l.b16 %v43
    %v92 = vunpack.c.l.b16 %v44
    %v93 = vunpack.c.l.b16 %v45
    %v94 = vunpack.c.l.b16 %v46
    %v95 = vunpack.c.l.b16 %v47
    %v96 = vunpack.c.l.b16 %v48
    %v97 = vunpack.c.l.b16 %v49
    %v98 = vunpack.c.l.b16 %v50
    %v99 = vunpack.c.l.b16 %v51
    %v100 = vunpack.c.l.b16 %v52
    %v101 = vunpack.c.l.b16 %v53
    %v102 = vunpack.c.l.b16 %v54
    %v103 = vunpack.c.l.b16 %v55
    %v104 = vunpack.c.l.b16 %v56
    %v105 = vpack.c.b16 %v90, %v89
    %v106 = vpack.c.b16 %v92, %v91
    %v107 = vpack.c.b16 %v94, %v93
    %v108 = vpack.c.b16 %v96, %v95
    %v109 = vpack.c.b16 %v98, %v97
    %v110 = vpack.c.b16 %v100, %v99
    %v111 = vpack.c.b16 %v102, %v101
    %v112 = vpack.c.b16 %v104, %v103
    %v137 = vunpack.c.l.b16 %v57
    %v138 = vunpack.c.l.b16 %v58
    %v139 = vunpack.c.l.b16 %v59
    %v140 = vunpack.c.l.b16 %v60
    %v141 = vunpack.c.l.b16 %v61
    %v142 = vunpack.c.l.b16 %v62
    %v143 = vunpack.c.l.b16 %v63
    %v144 = vunpack.c.l.b16 %v64
    %v145 = vunpack.c.l.b16 %v65
    %v146 = vunpack.c.l.b16 %v66
    %v147 = vunpack.c.l.b16 %v67
    %v148 = vunpack.c.l.b16 %v68
    %v149 = vunpack.c.l.b16 %v69
    %v150 = vunpack.c.l.b16 %v70
    %v151 = vunpack.c.l.b16 %v71
    %v152 = vunpack.c.l.b16 %v72
    %v153 = vpack.c.b16 %v138, %v137
    %v154 = vpack.c.b16 %v140, %v139
    %v155 = vpack.c.b16 %v142, %v141
    %v156 = vpack.c.b16 %v144, %v143
    %v157 = vpack.c.b16 %v146, %v145
    %v158 = vpack.c.b16 %v148, %v147
    %v159 = vpack.c.b16 %v150, %v149
    %v160 = vpack.c.b16 %v152, %v151
    %169 = vmatprep.subr.bf16.mxu0 0
    %170 = vmatpush1.bf16.msra.mxu0 %v153
    %171 = vmatprep.subr.bf16.mxu0 0
    %172 = vmatpush1.bf16.msra.mxu0 %v154
    %173 = vmatprep.subr.bf16.mxu0 0
    %174 = vmatpush1.bf16.msra.mxu0 %v155
    %175 = vmatprep.subr.bf16.mxu0 0
    %176 = vmatpush1.bf16.msra.mxu0 %v156
    %177 = vmatprep.subr.bf16.mxu0 0
    %178 = vmatpush1.bf16.msra.mxu0 %v157
    %179 = vmatprep.subr.bf16.mxu0 0
    %180 = vmatpush1.bf16.msra.mxu0 %v158
    %181 = vmatprep.subr.bf16.mxu0 0
    %182 = vmatpush1.bf16.msra.mxu0 %v159
    %183 = vmatprep.subr.bf16.mxu0 0
    %184 = vmatpush1.bf16.msra.mxu0 %v160
    %185 = vmatprep.subr.bf16.mxu0 0
    %186 = vmatpush1.bf16.msra.mxu0 0
    %187 = vmatprep.subr.bf16.mxu0 0
    %188 = vmatpush1.bf16.msra.mxu0 0
    %189 = vmatprep.subr.bf16.mxu0 0
    %190 = vmatpush1.bf16.msra.mxu0 0
    %191 = vmatprep.subr.bf16.mxu0 0
    %192 = vmatpush1.bf16.msra.mxu0 0
    %193 = vmatprep.subr.bf16.mxu0 0
    %194 = vmatpush1.bf16.msra.mxu0 0
    %195 = vmatprep.subr.bf16.mxu0 0
    %196 = vmatpush1.bf16.msra.mxu0 0
    %197 = vmatprep.subr.bf16.mxu0 0
    %198 = vmatpush1.bf16.msra.mxu0 0
    %199 = vmatprep.subr.bf16.mxu0 0
    %200 = vmatpush1.bf16.msra.mxu0 0
    %201 = vmatprep.mubr.bf16.mxu0 0
    %202 = vmatmul.mubr.bf16.gmra.mrb[0].mxu0 %v105
    %v203 = vpop.f32.mrb[0].mxu0
    %v204 = vadd.f32 0.0, %v203
    %v205 = vpop.f32.mrb[0].mxu0
    %v206 = vpop.f32.mrb[0].mxu0
    %v207 = vadd.f32 0.0, %v206
    %v208 = vpop.f32.mrb[0].mxu0
    %209 = vmatprep.mubr.bf16.mxu0 0
    %210 = vmatmul.mubr.bf16.gmra.mrb[0].mxu0 %v106
    %v211 = vpop.f32.mrb[0].mxu0
    %v212 = vadd.f32 0.0, %v211
    %v213 = vpop.f32.mrb[0].mxu0
    %v214 = vpop.f32.mrb[0].mxu0
    %v215 = vadd.f32 0.0, %v214
    %v216 = vpop.f32.mrb[0].mxu0
    %217 = vmatprep.mubr.bf16.mxu0 0
    %218 = vmatmul.mubr.bf16.gmra.mrb[0].mxu0 %v107
    %v219 = vpop.f32.mrb[0].mxu0
    %v220 = vadd.f32 0.0, %v219
    %v221 = vpop.f32.mrb[0].mxu0
    %v222 = vpop.f32.mrb[0].mxu0
    %v223 = vadd.f32 0.0, %v222
    %v224 = vpop.f32.mrb[0].mxu0
    %225 = vmatprep.mubr.bf16.mxu0 0
    %226 = vmatmul.mubr.bf16.gmra.mrb[0].mxu0 %v108
    %v227 = vpop.f32.mrb[0].mxu0
    %v228 = vadd.f32 0.0, %v227
    %v229 = vpop.f32.mrb[0].mxu0
    %v230 = vpop.f32.mrb[0].mxu0
    %v231 = vadd.f32 0.0, %v230
    %v232 = vpop.f32.mrb[0].mxu0
    %233 = vmatprep.mubr.bf16.mxu0 0
    %234 = vmatmul.mubr.bf16.gmra.mrb[0].mxu0 %v109
    %v235 = vpop.f32.mrb[0].mxu0
    %v236 = vadd.f32 0.0, %v235
    %v237 = vpop.f32.mrb[0].mxu0
    %v238 = vpop.f32.mrb[0].mxu0
    %v239 = vadd.f32 0.0, %v238
    %v240 = vpop.f32.mrb[0].mxu0
    %241 = vmatprep.mubr.bf16.mxu0 0
    %242 = vmatmul.mubr.bf16.gmra.mrb[0].mxu0 %v110
    %v243 = vpop.f32.mrb[0].mxu0
    %v244 = vadd.f32 0.0, %v243
    %v245 = vpop.f32.mrb[0].mxu0
    %v246 = vpop.f32.mrb[0].mxu0
    %v247 = vadd.f32 0.0, %v246
    %v248 = vpop.f32.mrb[0].mxu0
    %249 = vmatprep.mubr.bf16.mxu0 0
    %250 = vmatmul.mubr.bf16.gmra.mrb[0].mxu0 %v111
    %v251 = vpop.f32.mrb[0].mxu0
    %v252 = vadd.f32 0.0, %v251
    %v253 = vpop.f32.mrb[0].mxu0
    %v254 = vpop.f32.mrb[0].mxu0
    %v255 = vadd.f32 0.0, %v254
    %v256 = vpop.f32.mrb[0].mxu0
    %257 = vmatprep.mubr.bf16.mxu0 0
    %258 = vmatmul.mubr.bf16.gmra.mrb[0].mxu0 %v112
    %v259 = vpop.f32.mrb[0].mxu0
    %v260 = vadd.f32 0.0, %v259
    %v261 = vpop.f32.mrb[0].mxu0
    %v262 = vpop.f32.mrb[0].mxu0
    %v263 = vadd.f32 0.0, %v262
    %v264 = vpop.f32.mrb[0].mxu0
    %265 = vdwg.mxu0
    %v266 = vpack.c.bf16 %v207, %v204
    %v267 = vpack.c.bf16 %v215, %v212
    %v268 = vpack.c.bf16 %v223, %v220
    %v269 = vpack.c.bf16 %v231, %v228
    %v270 = vpack.c.bf16 %v239, %v236
    %v271 = vpack.c.bf16 %v247, %v244
    %v272 = vpack.c.bf16 %v255, %v252
    %v273 = vpack.c.bf16 %v263, %v260
    %v282 = vunpack.c.l.b16 %v266
    %v283 = vunpack.c.h.b16 %v266
    %v284 = vunpack.c.l.b16 %v267
    %v285 = vunpack.c.h.b16 %v267
    %v286 = vunpack.c.l.b16 %v268
    %v287 = vunpack.c.h.b16 %v268
    %v288 = vunpack.c.l.b16 %v269
    %v289 = vunpack.c.h.b16 %v269
    %v290 = vunpack.c.l.b16 %v270
    %v291 = vunpack.c.h.b16 %v270
    %v292 = vunpack.c.l.b16 %v271
    %v293 = vunpack.c.h.b16 %v271
    %v294 = vunpack.c.l.b16 %v272
    %v295 = vunpack.c.h.b16 %v272
    %v296 = vunpack.c.l.b16 %v273
    %v297 = vunpack.c.h.b16 %v273
    %v298 = vpack.c.b16 %v282, %v282
    %v299 = vpack.c.b16 %v283, %v283
    %v300 = vpack.c.b16 %v284, %v284
    %v301 = vpack.c.b16 %v285, %v285
    %v302 = vpack.c.b16 %v286, %v286
    %v303 = vpack.c.b16 %v287, %v287
    %v304 = vpack.c.b16 %v288, %v288
    %v305 = vpack.c.b16 %v289, %v289
    %v306 = vpack.c.b16 %v290, %v290
    %v307 = vpack.c.b16 %v291, %v291
    %v308 = vpack.c.b16 %v292, %v292
    %v309 = vpack.c.b16 %v293, %v293
    %v310 = vpack.c.b16 %v294, %v294
    %v311 = vpack.c.b16 %v295, %v295
    %v312 = vpack.c.b16 %v296, %v296
    %v313 = vpack.c.b16 %v297, %v297
    %330 = vst [vmem:[#allocation7] sm:$0xf] %v298
    %331 = vst [vmem:[#allocation7 + $0x4] sm:$0xf] %v299
    %332 = vst [vmem:[#allocation7 + $0x8] sm:$0xf] %v300
    %333 = vst [vmem:[#allocation7 + $0xc] sm:$0xf] %v301
    %334 = vst [vmem:[#allocation7 + $0x10] sm:$0xf] %v302
    %335 = vst [vmem:[#allocation7 + $0x14] sm:$0xf] %v303
    %336 = vst [vmem:[#allocation7 + $0x18] sm:$0xf] %v304
    %337 = vst [vmem:[#allocation7 + $0x1c] sm:$0xf] %v305
    %338 = vst [vmem:[#allocation7 + $0x20] sm:$0xf] %v306
    %339 = vst [vmem:[#allocation7 + $0x24] sm:$0xf] %v307
    %340 = vst [vmem:[#allocation7 + $0x28] sm:$0xf] %v308
    %341 = vst [vmem:[#allocation7 + $0x2c] sm:$0xf] %v309
    %342 = vst [vmem:[#allocation7 + $0x30] sm:$0xf] %v310
    %343 = vst [vmem:[#allocation7 + $0x34] sm:$0xf] %v311
    %344 = vst [vmem:[#allocation7 + $0x38] sm:$0xf] %v312
    %345 = vst [vmem:[#allocation7 + $0x3c] sm:$0xf] %v313
    // Predicated region
    $region18: #{tpu_custom_call.1} parent=1 // pred_check
      _
    $region19: #{tpu_custom_call.1} parent=1 // pred_check_branch
      %347 = sbr.rel (0) target = $region21
    $region20: #{tpu_custom_call.1} parent=1 // pred_region
      %s349 = ssub.s32 1024, 1024
      %350 = vsyncadd [#allocation4], %s349
      %s351 = sshll.u32 [#allocation7], 4
      %s352 = int_to_ptr.vmem [resolvable:$true] %s351
      %357 = dma.vmem_to_hbm [thread:$0]  %s352, 1024, %s2, [#allocation4], 64, 64, 4
    $region21: #{tpu_custom_call.1} parent=1 // pred_fallthru
      _
    // Predicated region
    $region22: #{tpu_custom_call.1} parent=1 // pred_check
      _
    $region23: #{tpu_custom_call.1} parent=1 // pred_check_branch
      %359 = sbr.rel (0) target = $region25
    $region24: #{tpu_custom_call.1} parent=1 // pred_region
      %360 = dma.done [#allocation4], 1024
    $region25: #{tpu_custom_call.1} parent=1 // pred_fallthru
      _
    %361 = vsyncpa [#allocation3], 1
    %362 = vsyncpa [#allocation6], 1
    %363 = vsyncpa [#allocation4], 1

</llo_original>
